<compile_context>
chip_gen: v5e
topology: v5e:2x2
jax: 0.10.0
libtpu: 0.0.40
codegen_flags: <defaults>
</compile_context>

<pallas_src>
import functools

import jax
import jax.numpy as jnp
from jax.experimental import pallas as pl
from jax.experimental.pallas import tpu as pltpu


def _masked_actnorm_kernel(x_ref, m_ref, bias_ref, scale_ref, o_ref, *, reverse):
    x = x_ref[...]                       # (TR, TS) f32
    bias = bias_ref[...]                 # (TR, 1)  f32
    scale = scale_ref[...]               # (TR, 1)  f32  = exp(+/-logs), precomputed
    if not reverse:
        out = (x + bias) * scale         # _center then _scale
    else:
        out = x * scale - bias           # _scale then _center
    # input[mask] = output[mask]
    o_ref[...] = jnp.where(m_ref[...] != 0, out, x)


def _pick_tile(total, base, max_tile):
    """Largest multiple of `base` that divides `total` and is <= max_tile.
    Falls back to the full extent when `total` is not a multiple of `base`
    (full-extent blocks are always legal)."""
    if total % base != 0 or total <= base:
        return total
    t = min(max_tile, total)
    t -= t % base
    while total % t != 0:
        t -= base
    return t


def masked_actnorm2d(x, mask, bias, logs, *, reverse=False):
    """x: [B,C,H,W] f32, mask: [B,C,H,W] bool, bias/logs: [1,C,1,1] f32."""
    assert mask.dtype == jnp.bool_, "mask must be bool (matches PyTorch assert)"
    B, C, H, W = x.shape
    HW = H * W
    R = B * C

    # Lane-dense 2-D layout; int8 mask instead of int32.
    x2 = x.reshape(R, HW)
    m2 = mask.reshape(R, HW).astype(jnp.int8)

    # Per-row (batch-major, channel-minor) params; exp hoisted out of the kernel.
    bias_c = bias.reshape(C, 1).astype(jnp.float32)
    logs_c = logs.reshape(C, 1).astype(jnp.float32)
    scale_c = jnp.exp(-logs_c) if reverse else jnp.exp(logs_c)
    bias_r = jnp.tile(bias_c, (B, 1))            # (R, 1)
    scale_r = jnp.tile(scale_c, (B, 1))          # (R, 1)

    # Tile sizes: sublane tile multiple of 8, lane tile multiple of 128.
    # Double-buffered VMEM footprint: 2 * (4+1+4) B * TR * TS <= ~9.5 MiB at
    # 256 x 2048 -> safely under the 32 MiB scoped default and v7x's 64 MiB.
    TR = _pick_tile(R, 8, 256)
    TS = _pick_tile(HW, 128, 2048)
    grid = (R // TR, HW // TS)

    kernel = functools.partial(_masked_actnorm_kernel, reverse=reverse)

    out = pl.pallas_call(
        kernel,
        out_shape=jax.ShapeDtypeStruct((R, HW), x.dtype),
        grid_spec=pltpu.PrefetchScalarGridSpec(
            num_scalar_prefetch=0,
            grid=grid,
            in_specs=[
                pl.BlockSpec((TR, TS), lambda r, s: (r, s)),   # x
                pl.BlockSpec((TR, TS), lambda r, s: (r, s)),   # mask (int8)
                pl.BlockSpec((TR, 1), lambda r, s: (r, 0)),    # bias   (constant over s)
                pl.BlockSpec((TR, 1), lambda r, s: (r, 0)),    # scale  (constant over s)
            ],
            out_specs=pl.BlockSpec((TR, TS), lambda r, s: (r, s)),
        ),
        compiler_params=pltpu.CompilerParams(
            dimension_semantics=("parallel", "parallel")),
    )(x2, m2, bias_r, scale_r)

    return out.reshape(B, C, H, W)


def init_actnorm_params(x, scale=1.0):
    """Data-dependent init, mirroring _ActNorm.initialize_parameters (plain JAX glue)."""
    bias = -jnp.mean(x, axis=(0, 2, 3), keepdims=True)                 # [1,C,1,1]
    var = jnp.mean((x + bias) ** 2, axis=(0, 2, 3), keepdims=True)     # [1,C,1,1]
    logs = jnp.log(scale / (jnp.sqrt(var) + 1e-6))                     # [1,C,1,1]
    return bias, logs


if __name__ == "__main__":
    B, C, H, W = 2, 4, 16, 16
    key = jax.random.PRNGKey(0)
    kx, km = jax.random.split(key)

    x = jax.random.normal(kx, (B, C, H, W), dtype=jnp.float32) * 0.7 + 0.25
    mask = jax.random.bernoulli(km, 0.5, (B, C, H, W))                  # bool

    # Deterministic parameter init (equivalent to first training-mode forward).
    bias, logs = init_actnorm_params(x, scale=1.0)

    # Masked forward.
    out = masked_actnorm2d(x, mask, bias, logs, reverse=False)
    jax.block_until_ready(out)
    ref = jnp.where(mask, (x + bias) * jnp.exp(logs), x)
    assert jnp.allclose(out, ref, atol=1e-5, rtol=1e-5)

    # All-True mask == plain _ActNorm.forward.
    full = jnp.ones((B, C, H, W), dtype=jnp.bool_)
    out_plain = masked_actnorm2d(x, full, bias, logs, reverse=False)
    jax.block_until_ready(out_plain)
    ref_plain = (x + bias) * jnp.exp(logs)
    assert jnp.allclose(out_plain, ref_plain, atol=1e-5, rtol=1e-5)

    # Reverse path round-trips through the kernel.
    x_rec = masked_actnorm2d(out_plain, full, bias, logs, reverse=True)
    jax.block_until_ready(x_rec)
    assert jnp.allclose(x_rec, x, atol=1e-4, rtol=1e-4)

    # TODO(synk): logdet accumulation (h*w*sum(logs)) and the masked logdet merge are not
    # implemented — _ActNorm.forward in this file returns only the tensor.
    # TODO(synk): the offset_mask / logs_offset / bias_offset path of _ActNorm.forward
    # (per-element parameter offsets) is not implemented.

    print("KERNEL_OK")
</pallas_src>

<mosaic_0001>
module attributes {stable_mosaic.version = 11 : i64} {
  func.func @_masked_actnorm_kernel(%arg0: i32, %arg1: i32, %arg2: memref<8x256xf32, #tpu.memory_space<vmem>>, %arg3: memref<8x256xi8, #tpu.memory_space<vmem>>, %arg4: memref<8x1xf32, #tpu.memory_space<vmem>>, %arg5: memref<8x1xf32, #tpu.memory_space<vmem>>, %arg6: memref<8x256xf32, #tpu.memory_space<vmem>>) attributes {dimension_semantics = [#tpu.dimension_semantics<parallel>, #tpu.dimension_semantics<parallel>], iteration_bounds = array<i64: 1, 1>, scalar_prefetch = 0 : i64, scratch_operands = 0 : i64, tpu.core_type = #tpu.core_type<tc>, window_params = [{transform_indices = @transform_0, window_bounds = array<i64: 8, 256>}, {transform_indices = @transform_1, window_bounds = array<i64: 8, 256>}, {transform_indices = @transform_2, window_bounds = array<i64: 8, 1>}, {transform_indices = @transform_3, window_bounds = array<i64: 8, 1>}, {transform_indices = @transform_4, window_bounds = array<i64: 8, 256>}]} {
    %c0 = arith.constant 0 : index
    %c0_0 = arith.constant 0 : index
    %0 = vector.load %arg2[%c0, %c0_0] : memref<8x256xf32, #tpu.memory_space<vmem>>, vector<8x256xf32>
    %c0_1 = arith.constant 0 : index
    %c0_2 = arith.constant 0 : index
    %1 = vector.load %arg4[%c0_1, %c0_2] : memref<8x1xf32, #tpu.memory_space<vmem>>, vector<8x1xf32>
    %c0_3 = arith.constant 0 : index
    %c0_4 = arith.constant 0 : index
    %2 = vector.load %arg5[%c0_3, %c0_4] : memref<8x1xf32, #tpu.memory_space<vmem>>, vector<8x1xf32>
    %3 = vector.broadcast %1 : vector<8x1xf32> to vector<8x256xf32>
    %4 = arith.addf %0, %3 : vector<8x256xf32>
    %5 = vector.broadcast %2 : vector<8x1xf32> to vector<8x256xf32>
    %6 = arith.mulf %4, %5 : vector<8x256xf32>
    %c0_5 = arith.constant 0 : index
    %c0_6 = arith.constant 0 : index
    %7 = vector.load %arg3[%c0_5, %c0_6] : memref<8x256xi8, #tpu.memory_space<vmem>>, vector<8x256xi8>
    %c0_i8 = arith.constant 0 : i8
    %8 = vector.broadcast %c0_i8 : i8 to vector<8x256xi8>
    %9 = arith.cmpi ne, %7, %8 : vector<8x256xi8>
    %10 = arith.select %9, %6, %0 : vector<8x256xi1>, vector<8x256xf32>
    %c0_7 = arith.constant 0 : index
    %c0_8 = arith.constant 0 : index
    %11 = vector.load %arg6[%c0_7, %c0_8] : memref<8x256xf32, #tpu.memory_space<vmem>>, vector<8x256xf32>
    tpu.vector_store %arg6[%c0_7, %c0_8], %10 {strides = array<i32>} : memref<8x256xf32, #tpu.memory_space<vmem>>, vector<8x256xf32>,
    return
  }
  func.func @transform_0(%arg0: i32, %arg1: i32) -> (i32, i32) {
    %c0_i32 = arith.constant 0 : i32
    return %arg0, %arg1 : i32, i32
  }
  func.func @transform_1(%arg0: i32, %arg1: i32) -> (i32, i32) {
    %c0_i32 = arith.constant 0 : i32
    return %arg0, %arg1 : i32, i32
  }
  func.func @transform_2(%arg0: i32, %arg1: i32) -> (i32, i32) {
    %c0_i32 = arith.constant 0 : i32
    %c0_i32_0 = arith.constant 0 : i32
    return %arg0, %c0_i32 : i32, i32
  }
  func.func @transform_3(%arg0: i32, %arg1: i32) -> (i32, i32) {
    %c0_i32 = arith.constant 0 : i32
    %c0_i32_0 = arith.constant 0 : i32
    return %arg0, %c0_i32 : i32, i32
  }
  func.func @transform_4(%arg0: i32, %arg1: i32) -> (i32, i32) {
    %c0_i32 = arith.constant 0 : i32
    return %arg0, %arg1 : i32, i32
  }
}

</mosaic_0001>

<llo_original>
// kernel: tpu_custom_call.1
$region0: #{tpu_custom_call.1}
  #allocation0 [shape = 'u32[]', space=smem, size = 0x4, offset = 0x4, fixed_abs, tag = 'smem constant byte address 0x4 - core index']
  #allocation1 [shape = 'u32[72,128]{1,0:T(1,128)}', space=vmem, size = 0x9000, scoped, tag = 'internal scratch']
  %s0 = inlined_call_operand.vmem [shape: f32[8,256], index: 0, kind: input, shape index: {}]
  %s1 = inlined_call_operand.hbm [shape: s8[8,256], index: 1, kind: input, shape index: {}]
  %s2 = inlined_call_operand.vmem [shape: f32[8,1], index: 2, kind: input, shape index: {}]
  %s3 = inlined_call_operand.vmem [shape: f32[8,1], index: 3, kind: input, shape index: {}]
  %s4 = inlined_call_operand.hbm [shape: f32[8,256], index: 4, kind: output, shape index: {}]
  %s5 = sld [smem:[#allocation0]]
  $region30: #{tpu_custom_call.1} parent=0
    _
  %s7 = ssub.s32 1, %s5
  %s8 = scalar_select 0, %s7, %s5
  $region1: #{tpu_custom_call.1} parent=0
    #allocation2 [shape = 'u8[2048]{0}', space=vmem, size = 0x800, scoped, tag = 'input window, operand 1, single buffered']
    #allocation3 [shape = 's32[1]{0}', space=sflag, size = 0x4, scoped, tag = 'scoped memory for tpu_custom_call.1']
    #allocation4 [shape = 's32[1]{0}', space=sflag, size = 0x4, scoped, tag = 'scoped memory for tpu_custom_call.1']
    #allocation5 [shape = 'u8[8192]{0}', space=vmem, size = 0x2000, scoped, tag = 'output window, operand 0, single buffered']
    %9 = vsyncpa [#allocation3], 0
    %10 = vsyncpa [#allocation4], 0
    // Predicated region
    $region2: #{tpu_custom_call.1} parent=1 // pred_check
      _
    $region3: #{tpu_custom_call.1} parent=1 // pred_check_branch
      %12 = sbr.rel (0) target = $region5
    $region4: #{tpu_custom_call.1} parent=1 // pred_region
      _
    $region5: #{tpu_custom_call.1} parent=1 // pred_fallthru
      _
    // Predicated region
    $region6: #{tpu_custom_call.1} parent=1 // pred_check
      _
    $region7: #{tpu_custom_call.1} parent=1 // pred_check_branch
      %14 = sbr.rel (0) target = $region9
    $region8: #{tpu_custom_call.1} parent=1 // pred_region
      %16 = vsyncadd [#allocation3], 0
      %s18 = sshll.u32 %s1, 4
      %s19 = int_to_ptr.hbm [resolvable:$true] %s18
      %s20 = sshll.u32 [#allocation2], 4
      %s21 = int_to_ptr.vmem [resolvable:$true] %s20
      %23 = dma.hbm_to_vmem [thread:$0]  %s19, 64, %s21, [#allocation3]
    $region9: #{tpu_custom_call.1} parent=1 // pred_fallthru
      _
    // Predicated region
    $region10: #{tpu_custom_call.1} parent=1 // pred_check
      _
    $region11: #{tpu_custom_call.1} parent=1 // pred_check_branch
      %25 = sbr.rel (0) target = $region13
    $region12: #{tpu_custom_call.1} parent=1 // pred_region
      _
    $region13: #{tpu_custom_call.1} parent=1 // pred_fallthru
      _
    // Predicated region
    $region14: #{tpu_custom_call.1} parent=1 // pred_check
      _
    $region15: #{tpu_custom_call.1} parent=1 // pred_check_branch
      %27 = sbr.rel (0) target = $region17
    $region16: #{tpu_custom_call.1} parent=1 // pred_region
      _
    $region17: #{tpu_custom_call.1} parent=1 // pred_fallthru
      _
    // Predicated region
    $region18: #{tpu_custom_call.1} parent=1 // pred_check
      _
    $region19: #{tpu_custom_call.1} parent=1 // pred_check_branch
      %29 = sbr.rel (0) target = $region21
    $region20: #{tpu_custom_call.1} parent=1 // pred_region
      %31 = dma.done [#allocation3], 64
    $region21: #{tpu_custom_call.1} parent=1 // pred_fallthru
      _
    %v34 = vld [vmem:[%s0] sm:$0xff]
    %v35 = vld [vmem:[%s0 + $0x8] sm:$0xff]
    %v36 = vld [vmem:[%s2] sm:$0xff]
    %v37 = vld [vmem:[%s3] sm:$0xff]
    %39 = vset.pattern.permute.xlu0 0
    %40 = vperm.xlu0 %39, %v36
    %v41 = vpop.permute.xlu0 %40
    %v43 = vadd.f32 %v34, %v41
    %v44 = vadd.f32 %v35, %v41
    %46 = vset.pattern.permute.xlu0 0
    %47 = vperm.xlu0 %46, %v37
    %v48 = vpop.permute.xlu0 %47
    %v50 = vmul.f32 %v43, %v48
    %v51 = vmul.f32 %v44, %v48
    %v52 = vld [vmem:[#allocation2] sm:$0xf]
    %vm53 = vnez %v52
    %v54 = vsel %vm53, 16843009, 0
    %v55 = vunpack.c.0.s8 %v54
    %v56 = vunpack.c.1.s8 %v54
    %vm57 = vcmp.ne.s32.totalorder %v55, 0
    %vm58 = vcmp.ne.s32.totalorder %v56, 0
    %v59 = vsel %vm57, %v50, %v34
    %v60 = vsel %vm58, %v51, %v35
    %61 = vst [vmem:[#allocation5] sm:$0xff] %v59
    %62 = vst [vmem:[#allocation5 + $0x8] sm:$0xff] %v60
    // Predicated region
    $region22: #{tpu_custom_call.1} parent=1 // pred_check
      _
    $region23: #{tpu_custom_call.1} parent=1 // pred_check_branch
      %64 = sbr.rel (0) target = $region25
    $region24: #{tpu_custom_call.1} parent=1 // pred_region
      %66 = vsyncadd [#allocation4], 0
      %s68 = sshll.u32 [#allocation5], 4
      %s69 = int_to_ptr.vmem [resolvable:$true] %s68
      %s70 = sshll.u32 %s4, 4
      %s71 = int_to_ptr.hbm [resolvable:$true] %s70
      %73 = dma.vmem_to_hbm [thread:$0]  %s69, 256, %s71, [#allocation4]
    $region25: #{tpu_custom_call.1} parent=1 // pred_fallthru
      _
    // Predicated region
    $region26: #{tpu_custom_call.1} parent=1 // pred_check
      _
    $region27: #{tpu_custom_call.1} parent=1 // pred_check_branch
      %75 = sbr.rel (0) target = $region29
    $region28: #{tpu_custom_call.1} parent=1 // pred_region
      %77 = dma.done [#allocation4], 256
    $region29: #{tpu_custom_call.1} parent=1 // pred_fallthru
      _
    %78 = vsyncpa [#allocation3], 1
    %79 = vsyncpa [#allocation4], 1

</llo_original>
